<compile_context>
chip_gen: v6e
topology: v6e:2x2x1
jax: 0.10.0
libtpu: 0.0.40
codegen_flags: <defaults>
</compile_context>

<pallas_src>
import math

import jax
import jax.numpy as jnp
from jax.experimental import pallas as pl
from jax.experimental.pallas import tpu as pltpu

LANE = 128      # lane width: every feature dim is padded to this
SUBLANE = 8     # sublane granularity for row (batch) padding


def _round_up(x, m):
    return (x + m - 1) // m * m


def _make_mlp_kernel(num_layers, padw):
    """Fused MLP kernel: Linear -> ReLU -> ... -> Linear on one batch tile."""

    def kernel(x_ref, params_ref, out_ref):
        h = x_ref[...]                                     # (TM, padw) f32
        for i in range(num_layers):                        # L is tiny & static
            blk = params_ref[i]                            # (padw + 8, padw)
            w = blk[:padw, :]                              # (padw, padw)
            b = blk[padw:padw + 1, :]                      # (1, padw)
            h = jnp.dot(h, w, preferred_element_type=jnp.float32) + b
            if i < num_layers - 1:                         # ReLU except last
                h = jnp.maximum(h, 0.0)
        out_ref[...] = h.astype(out_ref.dtype)

    return kernel


def pack_params(weights, biases, padw=LANE):
    """Pack per-layer (in_i, out_i) weights and (out_i,) biases into one slab.

    Returns a float32 array of shape (L, padw + SUBLANE, padw):
      slab[i, :in_i, :out_i] = W_i, slab[i, padw, :out_i] = b_i, zeros elsewhere.
    Do this once at init; it is the only place dtype casts happen.
    """
    num_layers = len(weights)
    slab = jnp.zeros((num_layers, padw + SUBLANE, padw), jnp.float32)
    for i, (w, b) in enumerate(zip(weights, biases)):
        fan_in, fan_out = w.shape
        assert fan_in <= padw and fan_out <= padw
        slab = slab.at[i, :fan_in, :fan_out].set(w.astype(jnp.float32))
        slab = slab.at[i, padw, :fan_out].set(b.astype(jnp.float32))
    return slab


def policy_estimator_forward_batched(states, packed_params, action_dim,
                                     block_m=128):
    """Batched fused-MLP forward.

    states        : (B, state_dim) float array
    packed_params : output of pack_params()
    returns       : (means, std), each (B, action_dim) float32
    """
    num_layers, pad_rows, padw = packed_params.shape
    assert pad_rows == padw + SUBLANE
    B, state_dim = states.shape

    # Batch tile: 128 rows per grid step (matches MXU tiles); for tiny batches
    # shrink the tile so we don't pad a single state up to 128 rows.
    tm = block_m if B >= block_m else _round_up(B, SUBLANE)
    b_pad = _round_up(B, tm)

    x = jnp.pad(states.astype(jnp.float32),
                ((0, b_pad - B), (0, padw - state_dim)))

    out = pl.pallas_call(
        _make_mlp_kernel(num_layers, padw),
        out_shape=jax.ShapeDtypeStruct((b_pad, padw), jnp.float32),
        grid=(b_pad // tm,),
        in_specs=[
            pl.BlockSpec((tm, padw), lambda m: (m, 0)),
            # Same block every grid step -> params stay resident in VMEM.
            pl.BlockSpec((num_layers, pad_rows, padw), lambda m: (0, 0, 0)),
        ],
        out_specs=pl.BlockSpec((tm, padw), lambda m: (m, 0)),
        compiler_params=pltpu.CompilerParams(
            dimension_semantics=("parallel",),
        ),
    )(x, packed_params)

    out = out[:B, :2 * action_dim]
    means = out[:, :action_dim]
    std = out[:, action_dim:]
    return means, std


def policy_estimator_forward(state, packed_params, action_dim):
    """Unbatched forward matching the PyTorch module's 1-D `out[:k]` slicing."""
    means, std = policy_estimator_forward_batched(
        state[None, :], packed_params, action_dim)
    return means[0], std[0]


def init_policy_params(key, state_dim, action_dim, hidden_size=32, n_hidden=1):
    """nn.Linear-style init: U(-1/sqrt(fan_in), 1/sqrt(fan_in)) for W and b.
    Weights are stored (in_features, out_features), i.e. transposed vs torch."""
    dims = [state_dim] + [hidden_size] * (1 + n_hidden) + [2 * action_dim]
    weights, biases = [], []
    for fan_in, fan_out in zip(dims[:-1], dims[1:]):
        key, kw, kb = jax.random.split(key, 3)
        bound = 1.0 / math.sqrt(fan_in)
        weights.append(jax.random.uniform(
            kw, (fan_in, fan_out), jnp.float32, minval=-bound, maxval=bound))
        biases.append(jax.random.uniform(
            kb, (fan_out,), jnp.float32, minval=-bound, maxval=bound))
    return weights, biases


def _ref_forward(states, weights, biases):
    h = states.astype(jnp.float32)
    for i, (w, b) in enumerate(zip(weights, biases)):
        h = h @ w + b[None, :]
        if i < len(weights) - 1:
            h = jnp.maximum(h, 0.0)
    return h


if __name__ == "__main__":
    state_dim = 16
    action_dim = 4
    hidden_size = 32
    n_hidden = 1        # net: Linear(16,32) ReLU Linear(32,32) ReLU Linear(32,8)
    batch = 256         # exercises grid=(2,) with 128-row tiles

    key = jax.random.PRNGKey(0)
    key, k_state = jax.random.split(key)

    weights, biases = init_policy_params(
        key, state_dim, action_dim, hidden_size=hidden_size, n_hidden=n_hidden)
    packed = pack_params(weights, biases)          # one-time packing / casting

    states = jax.random.normal(k_state, (batch, state_dim), jnp.float32)

    # Batched path.
    means, std = policy_estimator_forward_batched(states, packed, action_dim)
    jax.block_until_ready((means, std))

    # Unbatched path (original module semantics on a single 1-D state).
    means1, std1 = policy_estimator_forward(states[0], packed, action_dim)
    jax.block_until_ready((means1, std1))

    # Pure-JAX reference check.
    ref = _ref_forward(states, weights, biases)
    ref_means, ref_std = ref[:, :action_dim], ref[:, action_dim:]
    assert means.shape == (batch, action_dim) and std.shape == (batch, action_dim)
    assert jnp.allclose(means, ref_means, atol=1e-5, rtol=1e-5)
    assert jnp.allclose(std, ref_std, atol=1e-5, rtol=1e-5)
    assert means1.shape == (action_dim,) and std1.shape == (action_dim,)
    assert jnp.allclose(means1, ref_means[0], atol=1e-5, rtol=1e-5)
    assert jnp.allclose(std1, ref_std[0], atol=1e-5, rtol=1e-5)

    print("KERNEL_OK")
</pallas_src>

<mosaic_0001>
module attributes {stable_mosaic.version = 11 : i64} {
  func.func @kernel(%arg0: i32, %arg1: memref<128x128xf32, #tpu.memory_space<vmem>>, %arg2: memref<3x136x128xf32, #tpu.memory_space<vmem>>, %arg3: memref<128x128xf32, #tpu.memory_space<vmem>>) attributes {dimension_semantics = [#tpu.dimension_semantics<parallel>], iteration_bounds = array<i64: 2>, scalar_prefetch = 0 : i64, scratch_operands = 0 : i64, tpu.core_type = #tpu.core_type<tc>, window_params = [{transform_indices = @transform_0, window_bounds = array<i64: 128, 128>}, {pipeline_mode = #tpu.pipeline_mode<synchronous>, transform_indices = @transform_1, window_bounds = array<i64: 3, 136, 128>}, {transform_indices = @transform_2, window_bounds = array<i64: 128, 128>}]} {
    %c0 = arith.constant 0 : index
    %c0_0 = arith.constant 0 : index
    %0 = vector.load %arg1[%c0, %c0_0] : memref<128x128xf32, #tpu.memory_space<vmem>>, vector<128x128xf32>
    %c0_1 = arith.constant 0 : index
    %c0_2 = arith.constant 0 : index
    %c0_3 = arith.constant 0 : index
    %1 = vector.load %arg2[%c0_1, %c0_2, %c0_3] : memref<3x136x128xf32, #tpu.memory_space<vmem>>, vector<1x136x128xf32>
    %2 = vector.shape_cast %1 : vector<1x136x128xf32> to vector<136x128xf32>
    %3 = vector.extract_strided_slice %2 {offsets = [0, 0], sizes = [128, 128], strides = [1, 1]} : vector<136x128xf32> to vector<128x128xf32>
    %4 = vector.extract_strided_slice %2 {offsets = [128, 0], sizes = [1, 128], strides = [1, 1]} : vector<136x128xf32> to vector<1x128xf32>
    %cst = arith.constant dense<0.000000e+00> : vector<128x128xf32>
    %5 = tpu.matmul %0, %3, %cst {dimension_numbers = #tpu.dot_dimension_numbers<[1], [0], [0], [1], [0, 0, 1, 1], [], []>} : vector<128x128xf32>, vector<128x128xf32>, vector<128x128xf32> -> vector<128x128xf32>
    %6 = vector.broadcast %4 : vector<1x128xf32> to vector<128x128xf32>
    %7 = arith.addf %5, %6 : vector<128x128xf32>
    %cst_4 = arith.constant 0.000000e+00 : f32
    %8 = vector.broadcast %cst_4 : f32 to vector<128x128xf32>
    %9 = arith.maximumf %7, %8 : vector<128x128xf32>
    %c1 = arith.constant 1 : index
    %c0_5 = arith.constant 0 : index
    %c0_6 = arith.constant 0 : index
    %10 = vector.load %arg2[%c1, %c0_5, %c0_6] : memref<3x136x128xf32, #tpu.memory_space<vmem>>, vector<1x136x128xf32>
    %11 = vector.shape_cast %10 : vector<1x136x128xf32> to vector<136x128xf32>
    %12 = vector.extract_strided_slice %11 {offsets = [0, 0], sizes = [128, 128], strides = [1, 1]} : vector<136x128xf32> to vector<128x128xf32>
    %13 = vector.extract_strided_slice %11 {offsets = [128, 0], sizes = [1, 128], strides = [1, 1]} : vector<136x128xf32> to vector<1x128xf32>
    %cst_7 = arith.constant dense<0.000000e+00> : vector<128x128xf32>
    %14 = tpu.matmul %9, %12, %cst_7 {dimension_numbers = #tpu.dot_dimension_numbers<[1], [0], [0], [1], [0, 0, 1, 1], [], []>} : vector<128x128xf32>, vector<128x128xf32>, vector<128x128xf32> -> vector<128x128xf32>
    %15 = vector.broadcast %13 : vector<1x128xf32> to vector<128x128xf32>
    %16 = arith.addf %14, %15 : vector<128x128xf32>
    %cst_8 = arith.constant 0.000000e+00 : f32
    %17 = vector.broadcast %cst_8 : f32 to vector<128x128xf32>
    %18 = arith.maximumf %16, %17 : vector<128x128xf32>
    %c2 = arith.constant 2 : index
    %c0_9 = arith.constant 0 : index
    %c0_10 = arith.constant 0 : index
    %19 = vector.load %arg2[%c2, %c0_9, %c0_10] : memref<3x136x128xf32, #tpu.memory_space<vmem>>, vector<1x136x128xf32>
    %20 = vector.shape_cast %19 : vector<1x136x128xf32> to vector<136x128xf32>
    %21 = vector.extract_strided_slice %20 {offsets = [0, 0], sizes = [128, 128], strides = [1, 1]} : vector<136x128xf32> to vector<128x128xf32>
    %22 = vector.extract_strided_slice %20 {offsets = [128, 0], sizes = [1, 128], strides = [1, 1]} : vector<136x128xf32> to vector<1x128xf32>
    %cst_11 = arith.constant dense<0.000000e+00> : vector<128x128xf32>
    %23 = tpu.matmul %18, %21, %cst_11 {dimension_numbers = #tpu.dot_dimension_numbers<[1], [0], [0], [1], [0, 0, 1, 1], [], []>} : vector<128x128xf32>, vector<128x128xf32>, vector<128x128xf32> -> vector<128x128xf32>
    %24 = vector.broadcast %22 : vector<1x128xf32> to vector<128x128xf32>
    %25 = arith.addf %23, %24 : vector<128x128xf32>
    %c0_12 = arith.constant 0 : index
    %c0_13 = arith.constant 0 : index
    %26 = vector.load %arg3[%c0_12, %c0_13] : memref<128x128xf32, #tpu.memory_space<vmem>>, vector<128x128xf32>
    tpu.vector_store %arg3[%c0_12, %c0_13], %25 {strides = array<i32>} : memref<128x128xf32, #tpu.memory_space<vmem>>, vector<128x128xf32>,
    return
  }
  func.func @transform_0(%arg0: i32) -> (i32, i32) {
    %c0_i32 = arith.constant 0 : i32
    %c0_i32_0 = arith.constant 0 : i32
    return %arg0, %c0_i32 : i32, i32
  }
  func.func @transform_1(%arg0: i32) -> (i32, i32, i32) {
    %c0_i32 = arith.constant 0 : i32
    %c0_i32_0 = arith.constant 0 : i32
    %c0_i32_1 = arith.constant 0 : i32
    %c0_i32_2 = arith.constant 0 : i32
    return %c0_i32, %c0_i32_0, %c0_i32_1 : i32, i32, i32
  }
  func.func @transform_2(%arg0: i32) -> (i32, i32) {
    %c0_i32 = arith.constant 0 : i32
    %c0_i32_0 = arith.constant 0 : i32
    return %arg0, %c0_i32 : i32, i32
  }
}

</mosaic_0001>

<llo_original>
// kernel: tpu_custom_call.1
$region0: #{tpu_custom_call.1}
  #allocation0 [shape = 'u32[]', space=smem, size = 0x4, offset = 0x4, fixed_abs, tag = 'smem constant byte address 0x4 - core index']
  #allocation1 [shape = 'u32[144,128]{1,0:T(1,128)}', space=vmem, size = 0x12000, scoped, tag = 'internal scratch']
  %s0 = inlined_call_operand.hbm [shape: f32[256,128], index: 0, kind: input, shape index: {}]
  %s1 = inlined_call_operand.hbm [shape: f32[3,136,128], index: 1, kind: input, shape index: {}]
  %s2 = inlined_call_operand.hbm [shape: f32[256,128], index: 2, kind: output, shape index: {}]
  %s3 = sld [smem:[#allocation0]]
  $region49: #{tpu_custom_call.1} parent=0
    _
  %s5 = ssub.s32 1, %s3
  %s6 = scalar_select 0, %s5, %s3
  $region1: #{tpu_custom_call.1} parent=0
    #allocation2 [shape = 'u8[131072]{0}', space=vmem, size = 0x20000, scoped, tag = 'input window, operand 0']
    #allocation3 [shape = 's32[2]{0}', space=sflag, size = 0x8, scoped, tag = 'scoped memory for tpu_custom_call.1']
    #allocation4 [shape = 's32[2]{0}', space=sflag, size = 0x8, scoped, tag = 'scoped memory for tpu_custom_call.1']
    #allocation5 [shape = 'u8[208896]{0}', space=vmem, size = 0x33000, scoped, tag = 'input window, operand 1, single buffered']
    #allocation6 [shape = 's32[1]{0}', space=sflag, size = 0x4, scoped, tag = 'scoped memory for tpu_custom_call.1']
    #allocation7 [shape = 'u8[131072]{0}', space=vmem, size = 0x20000, scoped, tag = 'output window, operand 0']
    %7 = vsyncpa [#allocation3], 0
    %s8 = scalar_lea.sflag [#allocation3], 1
    %9 = vsyncpa %s8, 0
    %10 = vsyncpa [#allocation6], 0
    %11 = vsyncpa [#allocation4], 0
    %s12 = scalar_lea.sflag [#allocation4], 1
    %13 = vsyncpa %s12, 0
    loop: start=0, step=1, limit=4
    $region2: #{tpu_custom_call.1} parent=1 // loop_pre_header
      _
    $region3: #{tpu_custom_call.1} parent=1 // loop_header
      %s15 = sphi 0, %s19
      %p16 = scmp.ge.s32.totalorder %s15, 4
      %s25 = sphi 0, %s27
      %s28 = sphi 0, %s25
      %s29 = sphi 0, %s28
      %s45 = sphi 0, %s29
      %s49 = sphi 0, %s49
      %s51 = sphi 0, %s49
      %s52 = sphi 0, %s51
      %s66 = sphi 0, %s52
      %s72 = sphi 0, %s74
      %s75 = sphi 0, %s72
      %s76 = sphi 0, %s75
      %s92 = sphi 0, %s76
    $region4: #{tpu_custom_call.1} parent=1 // loop_header_branch
      %18 = sbr.rel (%p16) target = $region8
    $region5: #{tpu_custom_call.1} parent=1 // loop_body
      %s20 = ssub.s32 %s15, 1
      %s21 = ssub.s32 %s15, 2
      %s22 = sadd.s32 %s15, 1
      %s23 = ssub.s32 %s15, %s22
      %p24 = scmp.eq.s32.totalorder %s23, 0
      %s26 = sadd.s32 %s25, 1
      %s27 = scalar_select %p24, %s25, %s26
      %p30 = pneg %p24
      %p31 = scmp.eq.s32.totalorder %s15, 1
      %p32 = por %p30, %p31
      %p33 = scmp.ne.s32.totalorder %s25, %s28
      %p34 = scmp.eq.s32.totalorder %s15, 0
      %p35 = por %p33, %p34
      %p36 = scmp.ne.s32.totalorder %s25, %s28
      %p37 = scmp.eq.s32.totalorder %s20, 1
      %p38 = por %p36, %p37
      %p39 = scmp.ne.s32.totalorder %s28, %s29
      %p40 = scmp.eq.s32.totalorder %s20, 0
      %p41 = por %p39, %p40
      %p42 = scmp.ne.s32.totalorder %s28, %s29
      %p43 = scmp.eq.s32.totalorder %s21, 1
      %p44 = por %p42, %p43
      %p46 = scmp.ne.s32.totalorder %s29, %s45
      %p47 = scmp.eq.s32.totalorder %s21, 0
      %p48 = por %p46, %p47
      %s50 = sadd.s32 %s49, 1
      %p53 = scmp.eq.s32.totalorder %s15, 1
      %p54 = scmp.ne.s32.totalorder %s49, %s51
      %p55 = scmp.eq.s32.totalorder %s15, 0
      %p56 = por %p54, %p55
      %p57 = scmp.ne.s32.totalorder %s49, %s51
      %p58 = scmp.eq.s32.totalorder %s20, 1
      %p59 = por %p57, %p58
      %p60 = scmp.ne.s32.totalorder %s51, %s52
      %p61 = scmp.eq.s32.totalorder %s20, 0
      %p62 = por %p60, %p61
      %p63 = scmp.ne.s32.totalorder %s51, %s52
      %p64 = scmp.eq.s32.totalorder %s21, 1
      %p65 = por %p63, %p64
      %p67 = scmp.ne.s32.totalorder %s52, %s66
      %p68 = scmp.eq.s32.totalorder %s21, 0
      %p69 = por %p67, %p68
      %s70 = ssub.s32 %s15, %s22
      %p71 = scmp.eq.s32.totalorder %s70, 0
      %s73 = sadd.s32 %s72, 1
      %s74 = scalar_select %p71, %s72, %s73
      %p77 = pneg %p71
      %p78 = scmp.eq.s32.totalorder %s15, 1
      %p79 = por %p77, %p78
      %p80 = scmp.ne.s32.totalorder %s72, %s75
      %p81 = scmp.eq.s32.totalorder %s15, 0
      %p82 = por %p80, %p81
      %p83 = scmp.ne.s32.totalorder %s72, %s75
      %p84 = scmp.eq.s32.totalorder %s20, 1
      %p85 = por %p83, %p84
      %p86 = scmp.ne.s32.totalorder %s75, %s76
      %p87 = scmp.eq.s32.totalorder %s20, 0
      %p88 = por %p86, %p87
      %p89 = scmp.ne.s32.totalorder %s75, %s76
      %p90 = scmp.eq.s32.totalorder %s21, 1
      %p91 = por %p89, %p90
      %p93 = scmp.ne.s32.totalorder %s76, %s92
      %p94 = scmp.eq.s32.totalorder %s21, 0
      %p95 = por %p93, %p94
      %p96 = scmp.le.s32.totalorder 1, %s15
      %p97 = scmp.lt.s32.totalorder %s15, 3
      %p98 = pnand %p96, %p97
      %p99 = pneg %p98
      // Predicated region
      $region9: #{tpu_custom_call.1} parent=5 // pred_check
        _
      $region10: #{tpu_custom_call.1} parent=5 // pred_check_branch
        %101 = sbr.rel (%p98) target = $region12
      $region11: #{tpu_custom_call.1} parent=5 // pred_region
        %s102 = ssub.s32 %s15, 1
        // Predicated region
        $region13: #{tpu_custom_call.1} parent=11 // pred_check
          %p103 = pneg %p62
        $region14: #{tpu_custom_call.1} parent=11 // pred_check_branch
          %105 = sbr.rel (%p103) target = $region16
        $region15: #{tpu_custom_call.1} parent=11 // pred_region
          %s107 = ssub.s32 6528, 6528
          %108 = vsyncadd [#allocation6], %s107
          %s109 = sshll.u32 [#allocation5], 4
          %s110 = int_to_ptr.vmem [resolvable:$true] %s109
          %115 = dma.hbm_to_vmem [thread:$0]  %s1, 6528, %s110, [#allocation6], 128, 128, 8
        $region16: #{tpu_custom_call.1} parent=11 // pred_fallthru
          _
      $region12: #{tpu_custom_call.1} parent=5 // pred_fallthru
        _
      %p116 = scmp.lt.s32.totalorder %s15, 2
      // Predicated region
      $region17: #{tpu_custom_call.1} parent=5 // pred_check
        %p117 = pneg %p116
      $region18: #{tpu_custom_call.1} parent=5 // pred_check_branch
        %119 = sbr.rel (%p117) target = $region20
      $region19: #{tpu_custom_call.1} parent=5 // pred_region
        // Predicated region
        $region21: #{tpu_custom_call.1} parent=19 // pred_check
          %p120 = pneg %p35
        $region22: #{tpu_custom_call.1} parent=19 // pred_check_branch
          %122 = sbr.rel (%p120) target = $region24
        $region23: #{tpu_custom_call.1} parent=19 // pred_region
          %s123 = sand.u32 %s25, 1
          %s124 = scalar_lea.sflag [#allocation3], %s123
          %s125 = sand.u32 %s25, 1
          %s126 = smul.addr %s125, 128
          %s127 = scalar_lea.vmem [#allocation2], %s126
          %s128 = smul.u32 16, %s15
          %s130 = ssub.s32 2048, 2048
          %131 = vsyncadd %s124, %s130
          %s132 = smul.addr %s128, 128
          %s133 = scalar_lea.hbm %s0, %s132
          %s134 = sshll.u32 %s127, 4
          %s135 = int_to_ptr.vmem [resolvable:$true] %s134
          %140 = dma.hbm_to_vmem [thread:$0]  %s133, 2048, %s135, %s124, 128, 128, 8
        $region24: #{tpu_custom_call.1} parent=19 // pred_fallthru
          _
      $region20: #{tpu_custom_call.1} parent=5 // pred_fallthru
        _
      %p141 = scmp.le.s32.totalorder 1, %s15
      %p142 = scmp.lt.s32.totalorder %s15, 3
      %p143 = pnand %p141, %p142
      %p144 = pneg %p143
      // Predicated region
      $region25: #{tpu_custom_call.1} parent=5 // pred_check
        _
      $region26: #{tpu_custom_call.1} parent=5 // pred_check_branch
        %146 = sbr.rel (%p143) target = $region28
      $region27: #{tpu_custom_call.1} parent=5 // pred_region
        %s147 = ssub.s32 %s15, 1
        %s148 = sand.u32 %s28, 1
        %s149 = scalar_lea.sflag [#allocation3], %s148
        %s150 = sand.u32 %s28, 1
        %s151 = smul.addr %s150, 128
        %s152 = scalar_lea.vmem [#allocation2], %s151
        // Predicated region
        $region29: #{tpu_custom_call.1} parent=27 // pred_check
          %p153 = pneg %p41
        $region30: #{tpu_custom_call.1} parent=27 // pred_check_branch
          %155 = sbr.rel (%p153) target = $region32
        $region31: #{tpu_custom_call.1} parent=27 // pred_region
          %156 = dma.done %s149, 2048
        $region32: #{tpu_custom_call.1} parent=27 // pred_fallthru
          _
        // Predicated region
        $region33: #{tpu_custom_call.1} parent=27 // pred_check
          %p157 = pneg %p62
        $region34: #{tpu_custom_call.1} parent=27 // pred_check_branch
          %159 = sbr.rel (%p157) target = $region36
        $region35: #{tpu_custom_call.1} parent=27 // pred_region
          %160 = dma.done [#allocation6], 6528
        $region36: #{tpu_custom_call.1} parent=27 // pred_fallthru
          _
        %s161 = sand.u32 %s28, 1
        %s162 = scalar_lea.sflag [#allocation3], %s161
        %s163 = sand.u32 %s28, 1
        %s164 = smul.addr %s163, 128
        %s165 = scalar_lea.vmem [#allocation2], %s164
        %p166 = pneg %p41
        %p167 = pneg %p38
        %p168 = pneg %p62
        %p169 = pneg %p59
        %p170 = pneg %p88
        %p171 = pneg %p85
        %s172 = sand.u32 %s75, 1
        %s173 = scalar_lea.sflag [#allocation4], %s172
        %s174 = sand.u32 %s75, 1
        %s175 = smul.addr %s174, 128
        %s176 = scalar_lea.vmem [#allocation7], %s175
        %s177 = smul.u32 16, %s20
        %s178 = smul.u32 16, %s20
        %v179 = vld [vmem:[%s152] sm:$0xff]
        %v180 = vld [vmem:[%s152 + $0x8] sm:$0xff]
        %v181 = vld [vmem:[%s152 + $0x10] sm:$0xff]
        %v182 = vld [vmem:[%s152 + $0x18] sm:$0xff]
        %v183 = vld [vmem:[%s152 + $0x20] sm:$0xff]
        %v184 = vld [vmem:[%s152 + $0x28] sm:$0xff]
        %v185 = vld [vmem:[%s152 + $0x30] sm:$0xff]
        %v186 = vld [vmem:[%s152 + $0x38] sm:$0xff]
        %v187 = vld [vmem:[%s152 + $0x40] sm:$0xff]
        %v188 = vld [vmem:[%s152 + $0x48] sm:$0xff]
        %v189 = vld [vmem:[%s152 + $0x50] sm:$0xff]
        %v190 = vld [vmem:[%s152 + $0x58] sm:$0xff]
        %v191 = vld [vmem:[%s152 + $0x60] sm:$0xff]
        %v192 = vld [vmem:[%s152 + $0x68] sm:$0xff]
        %v193 = vld [vmem:[%s152 + $0x70] sm:$0xff]
        %v194 = vld [vmem:[%s152 + $0x78] sm:$0xff]
        %v195 = vld [vmem:[#allocation5] sm:$0xff]
        %v196 = vld [vmem:[#allocation5 + $0x8] sm:$0xff]
        %v197 = vld [vmem:[#allocation5 + $0x10] sm:$0xff]
        %v198 = vld [vmem:[#allocation5 + $0x18] sm:$0xff]
        %v199 = vld [vmem:[#allocation5 + $0x20] sm:$0xff]
        %v200 = vld [vmem:[#allocation5 + $0x28] sm:$0xff]
        %v201 = vld [vmem:[#allocation5 + $0x30] sm:$0xff]
        %v202 = vld [vmem:[#allocation5 + $0x38] sm:$0xff]
        %v203 = vld [vmem:[#allocation5 + $0x40] sm:$0xff]
        %v204 = vld [vmem:[#allocation5 + $0x48] sm:$0xff]
        %v205 = vld [vmem:[#allocation5 + $0x50] sm:$0xff]
        %v206 = vld [vmem:[#allocation5 + $0x58] sm:$0xff]
        %v207 = vld [vmem:[#allocation5 + $0x60] sm:$0xff]
        %v208 = vld [vmem:[#allocation5 + $0x68] sm:$0xff]
        %v209 = vld [vmem:[#allocation5 + $0x70] sm:$0xff]
        %v210 = vld [vmem:[#allocation5 + $0x78] sm:$0xff]
        %v211 = vld [vmem:[#allocation5 + $0x80] sm:$0xff]
        %v212 = vlaneseq
        %v213 = vshrl.u32 %v212, 7
        %v214 = vsub.s32 0, %v213
        %v215 = vrot.slane %v211, %v214
        %216 = vmatprep.subr.mxu0 0.0
        %217 = vmatpush1.msra.mxu0 %v210
        %218 = vmatprep.subr.mxu0 0.0
        %219 = vmatpush1.msra.mxu0 %v209
        %220 = vmatprep.subr.mxu0 0.0
        %221 = vmatpush1.msra.mxu0 %v208
        %222 = vmatprep.subr.mxu0 0.0
        %223 = vmatpush1.msra.mxu0 %v207
        %224 = vmatprep.subr.mxu0 0.0
        %225 = vmatpush1.msra.mxu0 %v206
        %226 = vmatprep.subr.mxu0 0.0
        %227 = vmatpush1.msra.mxu0 %v205
        %228 = vmatprep.subr.mxu0 0.0
        %229 = vmatpush1.msra.mxu0 %v204
        %230 = vmatprep.subr.mxu0 0.0
        %231 = vmatpush1.msra.mxu0 %v203
        %232 = vmatprep.subr.mxu0 0.0
        %233 = vmatpush1.msra.mxu0 %v202
        %234 = vmatprep.subr.mxu0 0.0
        %235 = vmatpush1.msra.mxu0 %v201
        %236 = vmatprep.subr.mxu0 0.0
        %237 = vmatpush1.msra.mxu0 %v200
        %238 = vmatprep.subr.mxu0 0.0
        %239 = vmatpush1.msra.mxu0 %v199
        %240 = vmatprep.subr.mxu0 0.0
        %241 = vmatpush1.msra.mxu0 %v198
        %242 = vmatprep.subr.mxu0 0.0
        %243 = vmatpush1.msra.mxu0 %v197
        %244 = vmatprep.subr.mxu0 0.0
        %245 = vmatpush1.msra.mxu0 %v196
        %246 = vmatprep.subr.mxu0 0.0
        %247 = vmatpush1.msra.mxu0 %v195
        %248 = vmatprep.subr.mxu0 0.0
        %249 = vmatpush2.msra.mxu0 0.0
        %250 = vmatprep.subr.mxu0 0.0
        %251 = vmatpush2.msra.mxu0 0.0
        %252 = vmatprep.subr.mxu0 0.0
        %253 = vmatpush2.msra.mxu0 0.0
        %254 = vmatprep.subr.mxu0 0.0
        %255 = vmatpush2.msra.mxu0 0.0
        %256 = vmatprep.subr.mxu0 0.0
        %257 = vmatpush2.msra.mxu0 0.0
        %258 = vmatprep.subr.mxu0 0.0
        %259 = vmatpush2.msra.mxu0 0.0
        %260 = vmatprep.subr.mxu0 0.0
        %261 = vmatpush2.msra.mxu0 0.0
        %262 = vmatprep.subr.mxu0 0.0
        %263 = vmatpush2.msra.mxu0 0.0
        %264 = vmatprep.subr.mxu0 0.0
        %265 = vmatpush2.msra.mxu0 0.0
        %266 = vmatprep.subr.mxu0 0.0
        %267 = vmatpush2.msra.mxu0 0.0
        %268 = vmatprep.subr.mxu0 0.0
        %269 = vmatpush2.msra.mxu0 0.0
        %270 = vmatprep.subr.mxu0 0.0
        %271 = vmatpush2.msra.mxu0 0.0
        %272 = vmatprep.subr.mxu0 0.0
        %273 = vmatpush2.msra.mxu0 0.0
        %274 = vmatprep.subr.mxu0 0.0
        %275 = vmatpush2.msra.mxu0 0.0
        %276 = vmatprep.subr.mxu0 0.0
        %277 = vmatpush2.msra.mxu0 0.0
        %278 = vmatprep.subr.mxu0 0.0
        %279 = vmatpush2.msra.mxu0 0.0
        %280 = vmatprep.mubr.f32.mxu0 0.0
        %281 = vmatmul.mubr.f32.gmra.mxu0 %v179
        %v282 = vpop.f32.mrf.mxu0
        %v283 = vadd.f32 %v215, %v282
        %v284 = vpop.f32.mrf.mxu0
        %285 = vmatprep.mubr.f32.mxu0 0.0
        %286 = vmatmul.mubr.f32.gmra.mxu0 %v180
        %v287 = vpop.f32.mrf.mxu0
        %v288 = vadd.f32 %v215, %v287
        %v289 = vpop.f32.mrf.mxu0
        %290 = vmatprep.mubr.f32.mxu0 0.0
        %291 = vmatmul.mubr.f32.gmra.mxu0 %v181
        %v292 = vpop.f32.mrf.mxu0
        %v293 = vadd.f32 %v215, %v292
        %v294 = vpop.f32.mrf.mxu0
        %295 = vmatprep.mubr.f32.mxu0 0.0
        %296 = vmatmul.mubr.f32.gmra.mxu0 %v182
        %v297 = vpop.f32.mrf.mxu0
        %v298 = vadd.f32 %v215, %v297
        %v299 = vpop.f32.mrf.mxu0
        %300 = vmatprep.mubr.f32.mxu0 0.0
        %301 = vmatmul.mubr.f32.gmra.mxu0 %v183
        %v302 = vpop.f32.mrf.mxu0
        %v303 = vadd.f32 %v215, %v302
        %v304 = vpop.f32.mrf.mxu0
        %305 = vmatprep.mubr.f32.mxu0 0.0
        %306 = vmatmul.mubr.f32.gmra.mxu0 %v184
        %v307 = vpop.f32.mrf.mxu0
        %v308 = vadd.f32 %v215, %v307
        %v309 = vpop.f32.mrf.mxu0
        %310 = vmatprep.mubr.f32.mxu0 0.0
        %311 = vmatmul.mubr.f32.gmra.mxu0 %v185
        %v312 = vpop.f32.mrf.mxu0
        %v313 = vadd.f32 %v215, %v312
        %v314 = vpop.f32.mrf.mxu0
        %315 = vmatprep.mubr.f32.mxu0 0.0
        %316 = vmatmul.mubr.f32.gmra.mxu0 %v186
        %v317 = vpop.f32.mrf.mxu0
        %v318 = vadd.f32 %v215, %v317
        %v319 = vpop.f32.mrf.mxu0
        %320 = vmatprep.mubr.f32.mxu0 0.0
        %321 = vmatmul.mubr.f32.gmra.mxu0 %v187
        %v322 = vpop.f32.mrf.mxu0
        %v323 = vadd.f32 %v215, %v322
        %v324 = vpop.f32.mrf.mxu0
        %325 = vmatprep.mubr.f32.mxu0 0.0
        %326 = vmatmul.mubr.f32.gmra.mxu0 %v188
        %v327 = vpop.f32.mrf.mxu0
        %v328 = vadd.f32 %v215, %v327
        %v329 = vpop.f32.mrf.mxu0
        %330 = vmatprep.mubr.f32.mxu0 0.0
        %331 = vmatmul.mubr.f32.gmra.mxu0 %v189
        %v332 = vpop.f32.mrf.mxu0
        %v333 = vadd.f32 %v215, %v332
        %v334 = vpop.f32.mrf.mxu0
        %335 = vmatprep.mubr.f32.mxu0 0.0
        %336 = vmatmul.mubr.f32.gmra.mxu0 %v190
        %v337 = vpop.f32.mrf.mxu0
        %v338 = vadd.f32 %v215, %v337
        %v339 = vpop.f32.mrf.mxu0
        %340 = vmatprep.mubr.f32.mxu0 0.0
        %341 = vmatmul.mubr.f32.gmra.mxu0 %v191
        %v342 = vpop.f32.mrf.mxu0
        %v343 = vadd.f32 %v215, %v342
        %v344 = vpop.f32.mrf.mxu0
        %345 = vmatprep.mubr.f32.mxu0 0.0
        %346 = vmatmul.mubr.f32.gmra.mxu0 %v192
        %v347 = vpop.f32.mrf.mxu0
        %v348 = vadd.f32 %v215, %v347
        %v349 = vpop.f32.mrf.mxu0
        %350 = vmatprep.mubr.f32.mxu0 0.0
        %351 = vmatmul.mubr.f32.gmra.mxu0 %v193
        %v352 = vpop.f32.mrf.mxu0
        %v353 = vadd.f32 %v215, %v352
        %v354 = vpop.f32.mrf.mxu0
        %355 = vmatprep.mubr.f32.mxu0 0.0
        %356 = vmatmul.mubr.f32.gmra.mxu0 %v194
        %v357 = vpop.f32.mrf.mxu0
        %v358 = vadd.f32 %v215, %v357
        %v359 = vpop.f32.mrf.mxu0
        %360 = vdwg.mxu0
        %v361 = vmax.f32 %v283, 0.0
        %v362 = vmax.f32 %v288, 0.0
        %v363 = vmax.f32 %v293, 0.0
        %v364 = vmax.f32 %v298, 0.0
        %v365 = vmax.f32 %v303, 0.0
        %v366 = vmax.f32 %v308, 0.0
        %v367 = vmax.f32 %v313, 0.0
        %v368 = vmax.f32 %v318, 0.0
        %v369 = vmax.f32 %v323, 0.0
        %v370 = vmax.f32 %v328, 0.0
        %v371 = vmax.f32 %v333, 0.0
        %v372 = vmax.f32 %v338, 0.0
        %v373 = vmax.f32 %v343, 0.0
        %v374 = vmax.f32 %v348, 0.0
        %v375 = vmax.f32 %v353, 0.0
        %v376 = vmax.f32 %v358, 0.0
        %s377 = scalar_lea.vmem [#allocation5], 136
        %v378 = vld [vmem:[%s377] sm:$0xff]
        %v379 = vld [vmem:[%s377 + $0x8] sm:$0xff]
        %v380 = vld [vmem:[%s377 + $0x10] sm:$0xff]
        %v381 = vld [vmem:[%s377 + $0x18] sm:$0xff]
        %v382 = vld [vmem:[%s377 + $0x20] sm:$0xff]
        %v383 = vld [vmem:[%s377 + $0x28] sm:$0xff]
        %v384 = vld [vmem:[%s377 + $0x30] sm:$0xff]
        %v385 = vld [vmem:[%s377 + $0x38] sm:$0xff]
        %v386 = vld [vmem:[%s377 + $0x40] sm:$0xff]
        %v387 = vld [vmem:[%s377 + $0x48] sm:$0xff]
        %v388 = vld [vmem:[%s377 + $0x50] sm:$0xff]
        %v389 = vld [vmem:[%s377 + $0x58] sm:$0xff]
        %v390 = vld [vmem:[%s377 + $0x60] sm:$0xff]
        %v391 = vld [vmem:[%s377 + $0x68] sm:$0xff]
        %v392 = vld [vmem:[%s377 + $0x70] sm:$0xff]
        %v393 = vld [vmem:[%s377 + $0x78] sm:$0xff]
        %v394 = vld [vmem:[%s377 + $0x80] sm:$0xff]
        %v395 = vlaneseq
        %v396 = vshrl.u32 %v395, 7
        %v397 = vsub.s32 0, %v396
        %v398 = vrot.slane %v394, %v397
        %399 = vmatprep.subr.mxu0 0.0
        %400 = vmatpush1.msra.mxu0 %v393
        %401 = vmatprep.subr.mxu0 0.0
        %402 = vmatpush1.msra.mxu0 %v392
        %403 = vmatprep.subr.mxu0 0.0
        %404 = vmatpush1.msra.mxu0 %v391
        %405 = vmatprep.subr.mxu0 0.0
        %406 = vmatpush1.msra.mxu0 %v390
        %407 = vmatprep.subr.mxu0 0.0
        %408 = vmatpush1.msra.mxu0 %v389
        %409 = vmatprep.subr.mxu0 0.0
        %410 = vmatpush1.msra.mxu0 %v388
        %411 = vmatprep.subr.mxu0 0.0
        %412 = vmatpush1.msra.mxu0 %v387
        %413 = vmatprep.subr.mxu0 0.0
        %414 = vmatpush1.msra.mxu0 %v386
        %415 = vmatprep.subr.mxu0 0.0
        %416 = vmatpush1.msra.mxu0 %v385
        %417 = vmatprep.subr.mxu0 0.0
        %418 = vmatpush1.msra.mxu0 %v384
        %419 = vmatprep.subr.mxu0 0.0
        %420 = vmatpush1.msra.mxu0 %v383
        %421 = vmatprep.subr.mxu0 0.0
        %422 = vmatpush1.msra.mxu0 %v382
        %423 = vmatprep.subr.mxu0 0.0
        %424 = vmatpush1.msra.mxu0 %v381
        %425 = vmatprep.subr.mxu0 0.0
        %426 = vmatpush1.msra.mxu0 %v380
        %427 = vmatprep.subr.mxu0 0.0
        %428 = vmatpush1.msra.mxu0 %v379
        %429 = vmatprep.subr.mxu0 0.0
        %430 = vmatpush1.msra.mxu0 %v378
        %431 = vmatprep.subr.mxu0 0.0
        %432 = vmatpush2.msra.mxu0 0.0
        %433 = vmatprep.subr.mxu0 0.0
        %434 = vmatpush2.msra.mxu0 0.0
        %435 = vmatprep.subr.mxu0 0.0
        %436 = vmatpush2.msra.mxu0 0.0
        %437 = vmatprep.subr.mxu0 0.0
        %438 = vmatpush2.msra.mxu0 0.0
        %439 = vmatprep.subr.mxu0 0.0
        %440 = vmatpush2.msra.mxu0 0.0
        %441 = vmatprep.subr.mxu0 0.0
        %442 = vmatpush2.msra.mxu0 0.0
        %443 = vmatprep.subr.mxu0 0.0
        %444 = vmatpush2.msra.mxu0 0.0
        %445 = vmatprep.subr.mxu0 0.0
        %446 = vmatpush2.msra.mxu0 0.0
        %447 = vmatprep.subr.mxu0 0.0
        %448 = vmatpush2.msra.mxu0 0.0
        %449 = vmatprep.subr.mxu0 0.0
        %450 = vmatpush2.msra.mxu0 0.0
        %451 = vmatprep.subr.mxu0 0.0
        %452 = vmatpush2.msra.mxu0 0.0
        %453 = vmatprep.subr.mxu0 0.0
        %454 = vmatpush2.msra.mxu0 0.0
        %455 = vmatprep.subr.mxu0 0.0
        %456 = vmatpush2.msra.mxu0 0.0
        %457 = vmatprep.subr.mxu0 0.0
        %458 = vmatpush2.msra.mxu0 0.0
        %459 = vmatprep.subr.mxu0 0.0
        %460 = vmatpush2.msra.mxu0 0.0
        %461 = vmatprep.subr.mxu0 0.0
        %462 = vmatpush2.msra.mxu0 0.0
        %463 = vmatprep.mubr.f32.mxu0 0.0
        %464 = vmatmul.mubr.f32.gmra.mxu0 %v361
        %v465 = vpop.f32.mrf.mxu0
        %v466 = vadd.f32 %v398, %v465
        %v467 = vpop.f32.mrf.mxu0
        %468 = vmatprep.mubr.f32.mxu0 0.0
        %469 = vmatmul.mubr.f32.gmra.mxu0 %v362
        %v470 = vpop.f32.mrf.mxu0
        %v471 = vadd.f32 %v398, %v470
        %v472 = vpop.f32.mrf.mxu0
        %473 = vmatprep.mubr.f32.mxu0 0.0
        %474 = vmatmul.mubr.f32.gmra.mxu0 %v363
        %v475 = vpop.f32.mrf.mxu0
        %v476 = vadd.f32 %v398, %v475
        %v477 = vpop.f32.mrf.mxu0
        %478 = vmatprep.mubr.f32.mxu0 0.0
        %479 = vmatmul.mubr.f32.gmra.mxu0 %v364
        %v480 = vpop.f32.mrf.mxu0
        %v481 = vadd.f32 %v398, %v480
        %v482 = vpop.f32.mrf.mxu0
        %483 = vmatprep.mubr.f32.mxu0 0.0
        %484 = vmatmul.mubr.f32.gmra.mxu0 %v365
        %v485 = vpop.f32.mrf.mxu0
        %v486 = vadd.f32 %v398, %v485
        %v487 = vpop.f32.mrf.mxu0
        %488 = vmatprep.mubr.f32.mxu0 0.0
        %489 = vmatmul.mubr.f32.gmra.mxu0 %v366
        %v490 = vpop.f32.mrf.mxu0
        %v491 = vadd.f32 %v398, %v490
        %v492 = vpop.f32.mrf.mxu0
        %493 = vmatprep.mubr.f32.mxu0 0.0
        %494 = vmatmul.mubr.f32.gmra.mxu0 %v367
        %v495 = vpop.f32.mrf.mxu0
        %v496 = vadd.f32 %v398, %v495
        %v497 = vpop.f32.mrf.mxu0
        %498 = vmatprep.mubr.f32.mxu0 0.0
        %499 = vmatmul.mubr.f32.gmra.mxu0 %v368
        %v500 = vpop.f32.mrf.mxu0
        %v501 = vadd.f32 %v398, %v500
        %v502 = vpop.f32.mrf.mxu0
        %503 = vmatprep.mubr.f32.mxu0 0.0
        %504 = vmatmul.mubr.f32.gmra.mxu0 %v369
        %v505 = vpop.f32.mrf.mxu0
        %v506 = vadd.f32 %v398, %v505
        %v507 = vpop.f32.mrf.mxu0
        %508 = vmatprep.mubr.f32.mxu0 0.0
        %509 = vmatmul.mubr.f32.gmra.mxu0 %v370
        %v510 = vpop.f32.mrf.mxu0
        %v511 = vadd.f32 %v398, %v510
        %v512 = vpop.f32.mrf.mxu0
        %513 = vmatprep.mubr.f32.mxu0 0.0
        %514 = vmatmul.mubr.f32.gmra.mxu0 %v371
        %v515 = vpop.f32.mrf.mxu0
        %v516 = vadd.f32 %v398, %v515
        %v517 = vpop.f32.mrf.mxu0
        %518 = vmatprep.mubr.f32.mxu0 0.0
        %519 = vmatmul.mubr.f32.gmra.mxu0 %v372
        %v520 = vpop.f32.mrf.mxu0
        %v521 = vadd.f32 %v398, %v520
        %v522 = vpop.f32.mrf.mxu0
        %523 = vmatprep.mubr.f32.mxu0 0.0
        %524 = vmatmul.mubr.f32.gmra.mxu0 %v373
        %v525 = vpop.f32.mrf.mxu0
        %v526 = vadd.f32 %v398, %v525
        %v527 = vpop.f32.mrf.mxu0
        %528 = vmatprep.mubr.f32.mxu0 0.0
        %529 = vmatmul.mubr.f32.gmra.mxu0 %v374
        %v530 = vpop.f32.mrf.mxu0
        %v531 = vadd.f32 %v398, %v530
        %v532 = vpop.f32.mrf.mxu0
        %533 = vmatprep.mubr.f32.mxu0 0.0
        %534 = vmatmul.mubr.f32.gmra.mxu0 %v375
        %v535 = vpop.f32.mrf.mxu0
        %v536 = vadd.f32 %v398, %v535
        %v537 = vpop.f32.mrf.mxu0
        %538 = vmatprep.mubr.f32.mxu0 0.0
        %539 = vmatmul.mubr.f32.gmra.mxu0 %v376
        %v540 = vpop.f32.mrf.mxu0
        %v541 = vadd.f32 %v398, %v540
        %v542 = vpop.f32.mrf.mxu0
        %543 = vdwg.mxu0
        %v544 = vmax.f32 %v466, 0.0
        %v545 = vmax.f32 %v471, 0.0
        %v546 = vmax.f32 %v476, 0.0
        %v547 = vmax.f32 %v481, 0.0
        %v548 = vmax.f32 %v486, 0.0
        %v549 = vmax.f32 %v491, 0.0
        %v550 = vmax.f32 %v496, 0.0
        %v551 = vmax.f32 %v501, 0.0
        %v552 = vmax.f32 %v506, 0.0
        %v553 = vmax.f32 %v511, 0.0
        %v554 = vmax.f32 %v516, 0.0
        %v555 = vmax.f32 %v521, 0.0
        %v556 = vmax.f32 %v526, 0.0
        %v557 = vmax.f32 %v531, 0.0
        %v558 = vmax.f32 %v536, 0.0
        %v559 = vmax.f32 %v541, 0.0
        %s560 = scalar_lea.vmem [#allocation5], 272
        %v561 = vld [vmem:[%s560] sm:$0xff]
        %v562 = vld [vmem:[%s560 + $0x8] sm:$0xff]
        %v563 = vld [vmem:[%s560 + $0x10] sm:$0xff]
        %v564 = vld [vmem:[%s560 + $0x18] sm:$0xff]
        %v565 = vld [vmem:[%s560 + $0x20] sm:$0xff]
        %v566 = vld [vmem:[%s560 + $0x28] sm:$0xff]
        %v567 = vld [vmem:[%s560 + $0x30] sm:$0xff]
        %v568 = vld [vmem:[%s560 + $0x38] sm:$0xff]
        %v569 = vld [vmem:[%s560 + $0x40] sm:$0xff]
        %v570 = vld [vmem:[%s560 + $0x48] sm:$0xff]
        %v571 = vld [vmem:[%s560 + $0x50] sm:$0xff]
        %v572 = vld [vmem:[%s560 + $0x58] sm:$0xff]
        %v573 = vld [vmem:[%s560 + $0x60] sm:$0xff]
        %v574 = vld [vmem:[%s560 + $0x68] sm:$0xff]
        %v575 = vld [vmem:[%s560 + $0x70] sm:$0xff]
        %v576 = vld [vmem:[%s560 + $0x78] sm:$0xff]
        %v577 = vld [vmem:[%s560 + $0x80] sm:$0xff]
        %v578 = vlaneseq
        %v579 = vshrl.u32 %v578, 7
        %v580 = vsub.s32 0, %v579
        %v581 = vrot.slane %v577, %v580
        %582 = vmatprep.subr.mxu0 0.0
        %583 = vmatpush1.msra.mxu0 %v576
        %584 = vmatprep.subr.mxu0 0.0
        %585 = vmatpush1.msra.mxu0 %v575
        %586 = vmatprep.subr.mxu0 0.0
        %587 = vmatpush1.msra.mxu0 %v574
        %588 = vmatprep.subr.mxu0 0.0
        %589 = vmatpush1.msra.mxu0 %v573
        %590 = vmatprep.subr.mxu0 0.0
        %591 = vmatpush1.msra.mxu0 %v572
        %592 = vmatprep.subr.mxu0 0.0
        %593 = vmatpush1.msra.mxu0 %v571
        %594 = vmatprep.subr.mxu0 0.0
        %595 = vmatpush1.msra.mxu0 %v570
        %596 = vmatprep.subr.mxu0 0.0
        %597 = vmatpush1.msra.mxu0 %v569
        %598 = vmatprep.subr.mxu0 0.0
        %599 = vmatpush1.msra.mxu0 %v568
        %600 = vmatprep.subr.mxu0 0.0
        %601 = vmatpush1.msra.mxu0 %v567
        %602 = vmatprep.subr.mxu0 0.0
        %603 = vmatpush1.msra.mxu0 %v566
        %604 = vmatprep.subr.mxu0 0.0
        %605 = vmatpush1.msra.mxu0 %v565
        %606 = vmatprep.subr.mxu0 0.0
        %607 = vmatpush1.msra.mxu0 %v564
        %608 = vmatprep.subr.mxu0 0.0
        %609 = vmatpush1.msra.mxu0 %v563
        %610 = vmatprep.subr.mxu0 0.0
        %611 = vmatpush1.msra.mxu0 %v562
        %612 = vmatprep.subr.mxu0 0.0
        %613 = vmatpush1.msra.mxu0 %v561
        %614 = vmatprep.subr.mxu0 0.0
        %615 = vmatpush2.msra.mxu0 0.0
        %616 = vmatprep.subr.mxu0 0.0
        %617 = vmatpush2.msra.mxu0 0.0
        %618 = vmatprep.subr.mxu0 0.0
        %619 = vmatpush2.msra.mxu0 0.0
        %620 = vmatprep.subr.mxu0 0.0
        %621 = vmatpush2.msra.mxu0 0.0
        %622 = vmatprep.subr.mxu0 0.0
        %623 = vmatpush2.msra.mxu0 0.0
        %624 = vmatprep.subr.mxu0 0.0
        %625 = vmatpush2.msra.mxu0 0.0
        %626 = vmatprep.subr.mxu0 0.0
        %627 = vmatpush2.msra.mxu0 0.0
        %628 = vmatprep.subr.mxu0 0.0
        %629 = vmatpush2.msra.mxu0 0.0
        %630 = vmatprep.subr.mxu0 0.0
        %631 = vmatpush2.msra.mxu0 0.0
        %632 = vmatprep.subr.mxu0 0.0
        %633 = vmatpush2.msra.mxu0 0.0
        %634 = vmatprep.subr.mxu0 0.0
        %635 = vmatpush2.msra.mxu0 0.0
        %636 = vmatprep.subr.mxu0 0.0
        %637 = vmatpush2.msra.mxu0 0.0
        %638 = vmatprep.subr.mxu0 0.0
        %639 = vmatpush2.msra.mxu0 0.0
        %640 = vmatprep.subr.mxu0 0.0
        %641 = vmatpush2.msra.mxu0 0.0
        %642 = vmatprep.subr.mxu0 0.0
        %643 = vmatpush2.msra.mxu0 0.0
        %644 = vmatprep.subr.mxu0 0.0
        %645 = vmatpush2.msra.mxu0 0.0
        %646 = vmatprep.mubr.f32.mxu0 0.0
        %647 = vmatmul.mubr.f32.gmra.mxu0 %v544
        %v648 = vpop.f32.mrf.mxu0
        %v649 = vadd.f32 %v581, %v648
        %v650 = vpop.f32.mrf.mxu0
        %651 = vmatprep.mubr.f32.mxu0 0.0
        %652 = vmatmul.mubr.f32.gmra.mxu0 %v545
        %v653 = vpop.f32.mrf.mxu0
        %v654 = vadd.f32 %v581, %v653
        %v655 = vpop.f32.mrf.mxu0
        %656 = vmatprep.mubr.f32.mxu0 0.0
        %657 = vmatmul.mubr.f32.gmra.mxu0 %v546
        %v658 = vpop.f32.mrf.mxu0
        %v659 = vadd.f32 %v581, %v658
        %v660 = vpop.f32.mrf.mxu0
        %661 = vmatprep.mubr.f32.mxu0 0.0
        %662 = vmatmul.mubr.f32.gmra.mxu0 %v547
        %v663 = vpop.f32.mrf.mxu0
        %v664 = vadd.f32 %v581, %v663
        %v665 = vpop.f32.mrf.mxu0
        %666 = vmatprep.mubr.f32.mxu0 0.0
        %667 = vmatmul.mubr.f32.gmra.mxu0 %v548
        %v668 = vpop.f32.mrf.mxu0
        %v669 = vadd.f32 %v581, %v668
        %v670 = vpop.f32.mrf.mxu0
        %671 = vmatprep.mubr.f32.mxu0 0.0
        %672 = vmatmul.mubr.f32.gmra.mxu0 %v549
        %v673 = vpop.f32.mrf.mxu0
        %v674 = vadd.f32 %v581, %v673
        %v675 = vpop.f32.mrf.mxu0
        %676 = vmatprep.mubr.f32.mxu0 0.0
        %677 = vmatmul.mubr.f32.gmra.mxu0 %v550
        %v678 = vpop.f32.mrf.mxu0
        %v679 = vadd.f32 %v581, %v678
        %v680 = vpop.f32.mrf.mxu0
        %681 = vmatprep.mubr.f32.mxu0 0.0
        %682 = vmatmul.mubr.f32.gmra.mxu0 %v551
        %v683 = vpop.f32.mrf.mxu0
        %v684 = vadd.f32 %v581, %v683
        %v685 = vpop.f32.mrf.mxu0
        %686 = vmatprep.mubr.f32.mxu0 0.0
        %687 = vmatmul.mubr.f32.gmra.mxu0 %v552
        %v688 = vpop.f32.mrf.mxu0
        %v689 = vadd.f32 %v581, %v688
        %v690 = vpop.f32.mrf.mxu0
        %691 = vmatprep.mubr.f32.mxu0 0.0
        %692 = vmatmul.mubr.f32.gmra.mxu0 %v553
        %v693 = vpop.f32.mrf.mxu0
        %v694 = vadd.f32 %v581, %v693
        %v695 = vpop.f32.mrf.mxu0
        %696 = vmatprep.mubr.f32.mxu0 0.0
        %697 = vmatmul.mubr.f32.gmra.mxu0 %v554
        %v698 = vpop.f32.mrf.mxu0
        %v699 = vadd.f32 %v581, %v698
        %v700 = vpop.f32.mrf.mxu0
        %701 = vmatprep.mubr.f32.mxu0 0.0
        %702 = vmatmul.mubr.f32.gmra.mxu0 %v555
        %v703 = vpop.f32.mrf.mxu0
        %v704 = vadd.f32 %v581, %v703
        %v705 = vpop.f32.mrf.mxu0
        %706 = vmatprep.mubr.f32.mxu0 0.0
        %707 = vmatmul.mubr.f32.gmra.mxu0 %v556
        %v708 = vpop.f32.mrf.mxu0
        %v709 = vadd.f32 %v581, %v708
        %v710 = vpop.f32.mrf.mxu0
        %711 = vmatprep.mubr.f32.mxu0 0.0
        %712 = vmatmul.mubr.f32.gmra.mxu0 %v557
        %v713 = vpop.f32.mrf.mxu0
        %v714 = vadd.f32 %v581, %v713
        %v715 = vpop.f32.mrf.mxu0
        %716 = vmatprep.mubr.f32.mxu0 0.0
        %717 = vmatmul.mubr.f32.gmra.mxu0 %v558
        %v718 = vpop.f32.mrf.mxu0
        %v719 = vadd.f32 %v581, %v718
        %v720 = vpop.f32.mrf.mxu0
        %721 = vmatprep.mubr.f32.mxu0 0.0
        %722 = vmatmul.mubr.f32.gmra.mxu0 %v559
        %v723 = vpop.f32.mrf.mxu0
        %v724 = vadd.f32 %v581, %v723
        %v725 = vpop.f32.mrf.mxu0
        %726 = vdwg.mxu0
        %727 = vst [vmem:[%s176] sm:$0xff] %v649
        %728 = vst [vmem:[%s176 + $0x8] sm:$0xff] %v654
        %729 = vst [vmem:[%s176 + $0x10] sm:$0xff] %v659
        %730 = vst [vmem:[%s176 + $0x18] sm:$0xff] %v664
        %731 = vst [vmem:[%s176 + $0x20] sm:$0xff] %v669
        %732 = vst [vmem:[%s176 + $0x28] sm:$0xff] %v674
        %733 = vst [vmem:[%s176 + $0x30] sm:$0xff] %v679
        %734 = vst [vmem:[%s176 + $0x38] sm:$0xff] %v684
        %735 = vst [vmem:[%s176 + $0x40] sm:$0xff] %v689
        %736 = vst [vmem:[%s176 + $0x48] sm:$0xff] %v694
        %737 = vst [vmem:[%s176 + $0x50] sm:$0xff] %v699
        %738 = vst [vmem:[%s176 + $0x58] sm:$0xff] %v704
        %739 = vst [vmem:[%s176 + $0x60] sm:$0xff] %v709
        %740 = vst [vmem:[%s176 + $0x68] sm:$0xff] %v714
        %741 = vst [vmem:[%s176 + $0x70] sm:$0xff] %v719
        %742 = vst [vmem:[%s176 + $0x78] sm:$0xff] %v724
        %s743 = sand.u32 %s75, 1
        %s744 = scalar_lea.sflag [#allocation4], %s743
        %s745 = sand.u32 %s75, 1
        %s746 = smul.addr %s745, 128
        %s747 = scalar_lea.vmem [#allocation7], %s746
        // Predicated region
        $region37: #{tpu_custom_call.1} parent=27 // pred_check
          %p748 = pneg %p85
        $region38: #{tpu_custom_call.1} parent=27 // pred_check_branch
          %750 = sbr.rel (%p748) target = $region40
        $region39: #{tpu_custom_call.1} parent=27 // pred_region
          %s751 = smul.u32 16, %s20
          %s753 = ssub.s32 2048, 2048
          %754 = vsyncadd %s744, %s753
          %s755 = smul.addr %s751, 128
          %s756 = scalar_lea.hbm %s2, %s755
          %s757 = sshll.u32 %s747, 4
          %s758 = int_to_ptr.vmem [resolvable:$true] %s757
          %763 = dma.vmem_to_hbm [thread:$0]  %s758, 2048, %s756, %s744, 128, 128, 8
        $region40: #{tpu_custom_call.1} parent=27 // pred_fallthru
          _
      $region28: #{tpu_custom_call.1} parent=5 // pred_fallthru
        _
      %p764 = scmp.le.s32.totalorder 2, %s15
      // Predicated region
      $region41: #{tpu_custom_call.1} parent=5 // pred_check
        %p765 = pneg %p764
      $region42: #{tpu_custom_call.1} parent=5 // pred_check_branch
        %767 = sbr.rel (%p765) target = $region44
      $region43: #{tpu_custom_call.1} parent=5 // pred_region
        %s768 = ssub.s32 %s15, 2
        // Predicated region
        $region45: #{tpu_custom_call.1} parent=43 // pred_check
          %p769 = pneg %p91
        $region46: #{tpu_custom_call.1} parent=43 // pred_check_branch
          %771 = sbr.rel (%p769) target = $region48
        $region47: #{tpu_custom_call.1} parent=43 // pred_region
          %s772 = sand.u32 %s76, 1
          %s773 = scalar_lea.sflag [#allocation4], %s772
          %s774 = sand.u32 %s76, 1
          %s775 = smul.addr %s774, 128
          %s776 = scalar_lea.vmem [#allocation7], %s775
          %777 = dma.done %s773, 2048
        $region48: #{tpu_custom_call.1} parent=43 // pred_fallthru
          _
      $region44: #{tpu_custom_call.1} parent=5 // pred_fallthru
        _
    $region6: #{tpu_custom_call.1} parent=1 // loop_footer
      %s19 = sadd.s32 1, %s15
    $region7: #{tpu_custom_call.1} parent=1 // loop_footer_branch
      %14 = sbr.rel target = $region3
    $region8: #{tpu_custom_call.1} parent=1 // loop_exit
      _
    %778 = vsyncpa [#allocation3], 1
    %s779 = scalar_lea.sflag [#allocation3], 1
    %780 = vsyncpa %s779, 1
    %781 = vsyncpa [#allocation6], 1
    %782 = vsyncpa [#allocation4], 1
    %s783 = scalar_lea.sflag [#allocation4], 1
    %784 = vsyncpa %s783, 1

</llo_original>
